<compile_context>
chip_gen: v6e
topology: v6e:2x2x1
jax: 0.10.0
libtpu: 0.0.40
codegen_flags: <defaults>
</compile_context>

<pallas_src>
import functools

import jax
import jax.numpy as jnp
from jax.experimental import pallas as pl
from jax.experimental.pallas import tpu as pltpu

STATE_DIM = 16
ACTION_DIM = 4
HIDDEN = 32
MAX_ACTION = 2.0
PACK = 8  # original rows packed per 128-lane packed row (8 * 16 = 128)

# Default tile in *packed* rows (== 8x original rows).
DEFAULT_BLOCK_ROWS = 4096


def _round_up(x, m):
    return ((x + m - 1) // m) * m


def _actor_kernel(x_ref, w1_ref, b1_ref, w3_ref, b3_ref, o_ref):
    # Packed layer 1: (bt,128) @ (128,256) block-diagonal == 8 row-parallel
    # copies of state @ W1 (f32 accumulate on the MXU), then bias + ReLU.
    h = jnp.dot(x_ref[...], w1_ref[...], preferred_element_type=jnp.float32)
    h = jnp.maximum(h + b1_ref[...], 0.0)
    # Packed layer 3 + sigmoid, scaled by max_action.
    z = jnp.dot(h, w3_ref[...], preferred_element_type=jnp.float32) + b3_ref[...]
    o_ref[...] = (MAX_ACTION * jax.nn.sigmoid(z)).astype(o_ref.dtype)


@functools.partial(jax.jit, static_argnames=("block_rows",))
def actor_forward(state, w1, b1, w3, b3, *, block_rows=DEFAULT_BLOCK_ROWS):
    """state: (B, STATE_DIM) f32 -> (B, ACTION_DIM) f32."""
    B = state.shape[0]

    # Pack 8 rows per 128 lanes. The reshape is a free row-major view; the pad
    # (and matching out[:B] slice) only triggers when B % 8 != 0 (<= 7 rows).
    Bp = _round_up(B, PACK)
    if Bp != B:
        state = jnp.pad(state, ((0, Bp - B), (0, 0)))
    n_rows = Bp // PACK
    x = state.reshape(n_rows, PACK * STATE_DIM)               # (B/8, 128)

    # Block-diagonal weights / tiled biases (tiny, built once per call).
    eye = jnp.eye(PACK, dtype=jnp.float32)
    w1_big = jnp.einsum("ij,kl->ikjl", eye, w1.astype(jnp.float32)).reshape(
        PACK * STATE_DIM, PACK * HIDDEN)                      # (128, 256)
    w3_big = jnp.einsum("ij,kl->ikjl", eye, w3.astype(jnp.float32)).reshape(
        PACK * HIDDEN, PACK * ACTION_DIM)                     # (256, 32)
    b1_big = jnp.tile(b1.reshape(1, HIDDEN), (1, PACK))       # (1, 256)
    b3_big = jnp.tile(b3.reshape(1, ACTION_DIM), (1, PACK))   # (1, 32)

    # Tile selection: multiple of 8 packed rows (sublane granule) or the full
    # (possibly <8) extent. Aim for ~4 grid steps when the batch allows it so
    # both v7x TensorCores get work and the pipeline can overlap DMA/compute.
    block_rows = max(8, _round_up(block_rows, 8))
    if n_rows < 16:
        bt = n_rows
    else:
        bt = min(block_rows, _round_up(pl.cdiv(n_rows, 4), 8))
    grid = (pl.cdiv(n_rows, bt),)

    # Weights/biases: one full block, same block index every step -> DMA'd
    # once and resident in VMEM across the whole grid.
    resident = lambda a: pl.BlockSpec(a.shape, lambda i: (0,) * a.ndim)

    cost = pl.CostEstimate(
        flops=2 * B * (STATE_DIM * HIDDEN + HIDDEN * ACTION_DIM),
        transcendentals=B * ACTION_DIM,  # sigmoid exp
        bytes_accessed=(
            Bp * 4 * (STATE_DIM + ACTION_DIM)
            + 4 * (PACK * STATE_DIM * PACK * HIDDEN
                   + PACK * HIDDEN
                   + PACK * HIDDEN * PACK * ACTION_DIM
                   + PACK * ACTION_DIM)
        ),
    )

    out_packed = pl.pallas_call(
        _actor_kernel,
        out_shape=jax.ShapeDtypeStruct((n_rows, PACK * ACTION_DIM), jnp.float32),
        grid=grid,
        in_specs=[
            pl.BlockSpec((bt, PACK * STATE_DIM), lambda i: (i, 0)),
            resident(w1_big),
            resident(b1_big),
            resident(w3_big),
            resident(b3_big),
        ],
        out_specs=pl.BlockSpec((bt, PACK * ACTION_DIM), lambda i: (i, 0)),
        compiler_params=pltpu.CompilerParams(
            dimension_semantics=("parallel",),
        ),
        cost_estimate=cost,
    )(x, w1_big, b1_big, w3_big, b3_big)

    out = out_packed.reshape(Bp, ACTION_DIM)  # free: (B/8,32) -> (B,4)
    return out if Bp == B else out[:B]


def init_params(key):
    """Deterministic synthetic init (PyTorch-style uniform fan-in bounds)."""
    k1, k2, k3, k4 = jax.random.split(key, 4)
    bound1 = 1.0 / (STATE_DIM ** 0.5)
    bound3 = 1.0 / (HIDDEN ** 0.5)
    # stored as (in, out) == transpose of PyTorch's (out, in)
    w1 = jax.random.uniform(k1, (STATE_DIM, HIDDEN), jnp.float32, -bound1, bound1)
    b1 = jax.random.uniform(k2, (1, HIDDEN), jnp.float32, -bound1, bound1)
    w3 = jax.random.uniform(k3, (HIDDEN, ACTION_DIM), jnp.float32, -bound3, bound3)
    b3 = jax.random.uniform(k4, (1, ACTION_DIM), jnp.float32, -bound3, bound3)
    return w1, b1, w3, b3


def reference_forward(state, w1, b1, w3, b3):
    h = jnp.maximum(state @ w1 + b1, 0.0)
    return MAX_ACTION * jax.nn.sigmoid(h @ w3 + b3)


if __name__ == "__main__":
    key = jax.random.PRNGKey(0)
    kx, kp, kx2, kx3 = jax.random.split(key, 4)
    w1, b1, w3, b3 = init_params(kp)

    # Small canonical test: B=8 -> one packed row, single grid step.
    B = 8
    state = jax.random.normal(kx, (B, STATE_DIM), jnp.float32)
    out = jax.block_until_ready(actor_forward(state, w1, b1, w3, b3))
    ref = reference_forward(state, w1, b1, w3, b3)
    assert out.shape == (B, ACTION_DIM)
    assert jnp.allclose(out, ref, atol=1e-5, rtol=1e-5)

    # Non-multiple-of-8 batch: exercises the small pad + out[:B] slice path.
    B2 = 100
    state2 = jax.random.normal(kx2, (B2, STATE_DIM), jnp.float32)
    out2 = jax.block_until_ready(actor_forward(state2, w1, b1, w3, b3))
    ref2 = reference_forward(state2, w1, b1, w3, b3)
    assert out2.shape == (B2, ACTION_DIM)
    assert jnp.allclose(out2, ref2, atol=1e-5, rtol=1e-5)

    # Multi-step grid with a ragged final block (n_rows=38, bt=8 -> 5 steps).
    B3 = 304
    state3 = jax.random.normal(kx3, (B3, STATE_DIM), jnp.float32)
    out3 = jax.block_until_ready(
        actor_forward(state3, w1, b1, w3, b3, block_rows=8)
    )
    ref3 = reference_forward(state3, w1, b1, w3, b3)
    assert out3.shape == (B3, ACTION_DIM)
    assert jnp.allclose(out3, ref3, atol=1e-5, rtol=1e-5)

    print("KERNEL_OK")
</pallas_src>

<mosaic_0001>
module attributes {stable_mosaic.version = 11 : i64} {
  func.func @_actor_kernel(%arg0: i32, %arg1: memref<1x128xf32, #tpu.memory_space<vmem>>, %arg2: memref<128x256xf32, #tpu.memory_space<vmem>>, %arg3: memref<1x256xf32, #tpu.memory_space<vmem>>, %arg4: memref<256x32xf32, #tpu.memory_space<vmem>>, %arg5: memref<1x32xf32, #tpu.memory_space<vmem>>, %arg6: memref<1x32xf32, #tpu.memory_space<vmem>>) attributes {dimension_semantics = [#tpu.dimension_semantics<parallel>], iteration_bounds = array<i64: 1>, scalar_prefetch = 0 : i64, scratch_operands = 0 : i64, tpu.core_type = #tpu.core_type<tc>, window_params = [{transform_indices = @transform_0, window_bounds = array<i64: 1, 128>}, {pipeline_mode = #tpu.pipeline_mode<synchronous>, transform_indices = @transform_1, window_bounds = array<i64: 128, 256>}, {pipeline_mode = #tpu.pipeline_mode<synchronous>, transform_indices = @transform_2, window_bounds = array<i64: 1, 256>}, {pipeline_mode = #tpu.pipeline_mode<synchronous>, transform_indices = @transform_3, window_bounds = array<i64: 256, 32>}, {pipeline_mode = #tpu.pipeline_mode<synchronous>, transform_indices = @transform_4, window_bounds = array<i64: 1, 32>}, {transform_indices = @transform_5, window_bounds = array<i64: 1, 32>}]} {
    %c0 = arith.constant 0 : index
    %c0_0 = arith.constant 0 : index
    %0 = vector.load %arg1[%c0, %c0_0] : memref<1x128xf32, #tpu.memory_space<vmem>>, vector<1x128xf32>
    %c0_1 = arith.constant 0 : index
    %c0_2 = arith.constant 0 : index
    %1 = vector.load %arg2[%c0_1, %c0_2] : memref<128x256xf32, #tpu.memory_space<vmem>>, vector<128x256xf32>
    %cst = arith.constant dense<0.000000e+00> : vector<1x256xf32>
    %2 = tpu.matmul %0, %1, %cst {dimension_numbers = #tpu.dot_dimension_numbers<[1], [0], [0], [1], [0, 0, 1, 1], [], []>} : vector<1x128xf32>, vector<128x256xf32>, vector<1x256xf32> -> vector<1x256xf32>
    %c0_3 = arith.constant 0 : index
    %c0_4 = arith.constant 0 : index
    %3 = vector.load %arg3[%c0_3, %c0_4] : memref<1x256xf32, #tpu.memory_space<vmem>>, vector<1x256xf32>
    %4 = arith.addf %2, %3 : vector<1x256xf32>
    %cst_5 = arith.constant 0.000000e+00 : f32
    %5 = vector.broadcast %cst_5 : f32 to vector<1x256xf32>
    %6 = arith.maximumf %4, %5 : vector<1x256xf32>
    %c0_6 = arith.constant 0 : index
    %c0_7 = arith.constant 0 : index
    %7 = vector.load %arg4[%c0_6, %c0_7] : memref<256x32xf32, #tpu.memory_space<vmem>>, vector<256x32xf32>
    %cst_8 = arith.constant dense<0.000000e+00> : vector<1x32xf32>
    %8 = tpu.matmul %6, %7, %cst_8 {dimension_numbers = #tpu.dot_dimension_numbers<[1], [0], [0], [1], [0, 0, 1, 1], [], []>} : vector<1x256xf32>, vector<256x32xf32>, vector<1x32xf32> -> vector<1x32xf32>
    %c0_9 = arith.constant 0 : index
    %c0_10 = arith.constant 0 : index
    %9 = vector.load %arg5[%c0_9, %c0_10] : memref<1x32xf32, #tpu.memory_space<vmem>>, vector<1x32xf32>
    %10 = arith.addf %8, %9 : vector<1x32xf32>
    %11 = arith.negf %10 : vector<1x32xf32>
    %12 = math.exp %11 : vector<1x32xf32>
    %cst_11 = arith.constant 1.000000e+00 : f32
    %13 = vector.broadcast %cst_11 : f32 to vector<1x32xf32>
    %14 = arith.addf %13, %12 : vector<1x32xf32>
    %15 = arith.divf %13, %14 : vector<1x32xf32>
    %cst_12 = arith.constant 2.000000e+00 : f32
    %16 = vector.broadcast %cst_12 : f32 to vector<1x32xf32>
    %17 = arith.mulf %16, %15 : vector<1x32xf32>
    %c0_13 = arith.constant 0 : index
    %c0_14 = arith.constant 0 : index
    %18 = vector.load %arg6[%c0_13, %c0_14] : memref<1x32xf32, #tpu.memory_space<vmem>>, vector<1x32xf32>
    tpu.vector_store %arg6[%c0_13, %c0_14], %17 {strides = array<i32>} : memref<1x32xf32, #tpu.memory_space<vmem>>, vector<1x32xf32>,
    return
  }
  func.func @transform_0(%arg0: i32) -> (i32, i32) {
    %c0_i32 = arith.constant 0 : i32
    %c0_i32_0 = arith.constant 0 : i32
    return %arg0, %c0_i32 : i32, i32
  }
  func.func @transform_1(%arg0: i32) -> (i32, i32) {
    %c0_i32 = arith.constant 0 : i32
    %c0_i32_0 = arith.constant 0 : i32
    %c0_i32_1 = arith.constant 0 : i32
    return %c0_i32, %c0_i32_0 : i32, i32
  }
  func.func @transform_2(%arg0: i32) -> (i32, i32) {
    %c0_i32 = arith.constant 0 : i32
    %c0_i32_0 = arith.constant 0 : i32
    %c0_i32_1 = arith.constant 0 : i32
    return %c0_i32, %c0_i32_0 : i32, i32
  }
  func.func @transform_3(%arg0: i32) -> (i32, i32) {
    %c0_i32 = arith.constant 0 : i32
    %c0_i32_0 = arith.constant 0 : i32
    %c0_i32_1 = arith.constant 0 : i32
    return %c0_i32, %c0_i32_0 : i32, i32
  }
  func.func @transform_4(%arg0: i32) -> (i32, i32) {
    %c0_i32 = arith.constant 0 : i32
    %c0_i32_0 = arith.constant 0 : i32
    %c0_i32_1 = arith.constant 0 : i32
    return %c0_i32, %c0_i32_0 : i32, i32
  }
  func.func @transform_5(%arg0: i32) -> (i32, i32) {
    %c0_i32 = arith.constant 0 : i32
    %c0_i32_0 = arith.constant 0 : i32
    return %arg0, %c0_i32 : i32, i32
  }
}

</mosaic_0001>

<llo_original>
// kernel: actor_forward.1
$region0: #{actor_forward.1}
  #allocation0 [shape = 'u32[]', space=smem, size = 0x4, offset = 0x4, fixed_abs, tag = 'smem constant byte address 0x4 - core index']
  #allocation1 [shape = 'u32[144,128]{1,0:T(1,128)}', space=vmem, size = 0x12000, scoped, tag = 'internal scratch']
  %s0 = inlined_call_operand.vmem [shape: f32[1,128], index: 0, kind: input, shape index: {}]
  %s1 = inlined_call_operand.vmem [shape: f32[128,256], index: 1, kind: input, shape index: {}]
  %s2 = inlined_call_operand.vmem [shape: f32[1,256], index: 2, kind: input, shape index: {}]
  %s3 = inlined_call_operand.vmem [shape: f32[256,32], index: 3, kind: input, shape index: {}]
  %s4 = inlined_call_operand.vmem [shape: f32[1,32], index: 4, kind: input, shape index: {}]
  %s5 = inlined_call_operand.vmem [shape: f32[1,32], index: 5, kind: output, shape index: {}]
  %s6 = sld [smem:[#allocation0]]
  $region30: #{actor_forward.1} parent=0
    _
  %s8 = ssub.s32 1, %s6
  %s9 = scalar_select 0, %s8, %s6
  // Predicated region
  $region2: #{actor_forward.1} parent=0 // pred_check
    _
  $region3: #{actor_forward.1} parent=0 // pred_check_branch
    %11 = sbr.rel (0) target = $region5
  $region4: #{actor_forward.1} parent=0 // pred_region
    _
  $region5: #{actor_forward.1} parent=0 // pred_fallthru
    _
  // Predicated region
  $region6: #{actor_forward.1} parent=0 // pred_check
    _
  $region7: #{actor_forward.1} parent=0 // pred_check_branch
    %13 = sbr.rel (0) target = $region9
  $region8: #{actor_forward.1} parent=0 // pred_region
    _
  $region9: #{actor_forward.1} parent=0 // pred_fallthru
    _
  // Predicated region
  $region10: #{actor_forward.1} parent=0 // pred_check
    _
  $region11: #{actor_forward.1} parent=0 // pred_check_branch
    %15 = sbr.rel (0) target = $region13
  $region12: #{actor_forward.1} parent=0 // pred_region
    _
  $region13: #{actor_forward.1} parent=0 // pred_fallthru
    _
  // Predicated region
  $region14: #{actor_forward.1} parent=0 // pred_check
    _
  $region15: #{actor_forward.1} parent=0 // pred_check_branch
    %17 = sbr.rel (0) target = $region17
  $region16: #{actor_forward.1} parent=0 // pred_region
    _
  $region17: #{actor_forward.1} parent=0 // pred_fallthru
    _
  // Predicated region
  $region18: #{actor_forward.1} parent=0 // pred_check
    _
  $region19: #{actor_forward.1} parent=0 // pred_check_branch
    %19 = sbr.rel (0) target = $region21
  $region20: #{actor_forward.1} parent=0 // pred_region
    _
  $region21: #{actor_forward.1} parent=0 // pred_fallthru
    _
  %v20 = vld [vmem:[%s0] sm:$0x1]
  %v21 = vld [vmem:[%s1] sm:$0xff]
  %v22 = vld [vmem:[%s1 + $0x8] sm:$0xff]
  %v23 = vld [vmem:[%s1 + $0x10] sm:$0xff]
  %v24 = vld [vmem:[%s1 + $0x18] sm:$0xff]
  %v25 = vld [vmem:[%s1 + $0x20] sm:$0xff]
  %v26 = vld [vmem:[%s1 + $0x28] sm:$0xff]
  %v27 = vld [vmem:[%s1 + $0x30] sm:$0xff]
  %v28 = vld [vmem:[%s1 + $0x38] sm:$0xff]
  %v29 = vld [vmem:[%s1 + $0x40] sm:$0xff]
  %v30 = vld [vmem:[%s1 + $0x48] sm:$0xff]
  %v31 = vld [vmem:[%s1 + $0x50] sm:$0xff]
  %v32 = vld [vmem:[%s1 + $0x58] sm:$0xff]
  %v33 = vld [vmem:[%s1 + $0x60] sm:$0xff]
  %v34 = vld [vmem:[%s1 + $0x68] sm:$0xff]
  %v35 = vld [vmem:[%s1 + $0x70] sm:$0xff]
  %v36 = vld [vmem:[%s1 + $0x78] sm:$0xff]
  %v37 = vld [vmem:[%s1 + $0x80] sm:$0xff]
  %v38 = vld [vmem:[%s1 + $0x88] sm:$0xff]
  %v39 = vld [vmem:[%s1 + $0x90] sm:$0xff]
  %v40 = vld [vmem:[%s1 + $0x98] sm:$0xff]
  %v41 = vld [vmem:[%s1 + $0xa0] sm:$0xff]
  %v42 = vld [vmem:[%s1 + $0xa8] sm:$0xff]
  %v43 = vld [vmem:[%s1 + $0xb0] sm:$0xff]
  %v44 = vld [vmem:[%s1 + $0xb8] sm:$0xff]
  %v45 = vld [vmem:[%s1 + $0xc0] sm:$0xff]
  %v46 = vld [vmem:[%s1 + $0xc8] sm:$0xff]
  %v47 = vld [vmem:[%s1 + $0xd0] sm:$0xff]
  %v48 = vld [vmem:[%s1 + $0xd8] sm:$0xff]
  %v49 = vld [vmem:[%s1 + $0xe0] sm:$0xff]
  %v50 = vld [vmem:[%s1 + $0xe8] sm:$0xff]
  %v51 = vld [vmem:[%s1 + $0xf0] sm:$0xff]
  %v52 = vld [vmem:[%s1 + $0xf8] sm:$0xff]
  %v53 = vld [vmem:[%s2] sm:$0x3]
  %v55 = vlaneseq
  %v56 = vshrl.u32 %v55, 7
  %v57 = vsub.s32 0, %v56
  %v58 = vrot.slane %v53, %v57
  %v59 = vlaneseq
  %v60 = vshrl.u32 %v59, 7
  %v61 = vsub.s32 1, %v60
  %v62 = vrot.slane %v53, %v61
  %65 = vmatprep.subr.mxu0 %v52
  %66 = vmatpush1.msra.mxu0 %v51
  %67 = vmatprep.subr.mxu0 %v50
  %68 = vmatpush1.msra.mxu0 %v49
  %69 = vmatprep.subr.mxu0 %v48
  %70 = vmatpush1.msra.mxu0 %v47
  %71 = vmatprep.subr.mxu0 %v46
  %72 = vmatpush1.msra.mxu0 %v45
  %73 = vmatprep.subr.mxu0 %v44
  %74 = vmatpush1.msra.mxu0 %v43
  %75 = vmatprep.subr.mxu0 %v42
  %76 = vmatpush1.msra.mxu0 %v41
  %77 = vmatprep.subr.mxu0 %v40
  %78 = vmatpush1.msra.mxu0 %v39
  %79 = vmatprep.subr.mxu0 %v38
  %80 = vmatpush1.msra.mxu0 %v37
  %81 = vmatprep.subr.mxu0 %v36
  %82 = vmatpush1.msra.mxu0 %v35
  %83 = vmatprep.subr.mxu0 %v34
  %84 = vmatpush1.msra.mxu0 %v33
  %85 = vmatprep.subr.mxu0 %v32
  %86 = vmatpush1.msra.mxu0 %v31
  %87 = vmatprep.subr.mxu0 %v30
  %88 = vmatpush1.msra.mxu0 %v29
  %89 = vmatprep.subr.mxu0 %v28
  %90 = vmatpush1.msra.mxu0 %v27
  %91 = vmatprep.subr.mxu0 %v26
  %92 = vmatpush1.msra.mxu0 %v25
  %93 = vmatprep.subr.mxu0 %v24
  %94 = vmatpush1.msra.mxu0 %v23
  %95 = vmatprep.subr.mxu0 %v22
  %96 = vmatpush1.msra.mxu0 %v21
  %97 = vmatprep.subr.mxu0 0.0
  %98 = vmatpush2.msra.mxu0 0.0
  %99 = vmatprep.subr.mxu0 0.0
  %100 = vmatpush2.msra.mxu0 0.0
  %101 = vmatprep.subr.mxu0 0.0
  %102 = vmatpush2.msra.mxu0 0.0
  %103 = vmatprep.subr.mxu0 0.0
  %104 = vmatpush2.msra.mxu0 0.0
  %105 = vmatprep.subr.mxu0 0.0
  %106 = vmatpush2.msra.mxu0 0.0
  %107 = vmatprep.subr.mxu0 0.0
  %108 = vmatpush2.msra.mxu0 0.0
  %109 = vmatprep.subr.mxu0 0.0
  %110 = vmatpush2.msra.mxu0 0.0
  %111 = vmatprep.subr.mxu0 0.0
  %112 = vmatpush2.msra.mxu0 0.0
  %113 = vmatprep.subr.mxu0 0.0
  %114 = vmatpush2.msra.mxu0 0.0
  %115 = vmatprep.subr.mxu0 0.0
  %116 = vmatpush2.msra.mxu0 0.0
  %117 = vmatprep.subr.mxu0 0.0
  %118 = vmatpush2.msra.mxu0 0.0
  %119 = vmatprep.subr.mxu0 0.0
  %120 = vmatpush2.msra.mxu0 0.0
  %121 = vmatprep.subr.mxu0 0.0
  %122 = vmatpush2.msra.mxu0 0.0
  %123 = vmatprep.subr.mxu0 0.0
  %124 = vmatpush2.msra.mxu0 0.0
  %125 = vmatprep.subr.mxu0 0.0
  %126 = vmatpush2.msra.mxu0 0.0
  %127 = vmatprep.subr.mxu0 0.0
  %128 = vmatpush2.msra.mxu0 0.0
  %129 = vmatprep.mubr.f32.mxu0 0.0
  %130 = vmatmul.mubr.f32.gmra.mxu0 %v20
  %v131 = vpop.f32.mrf.mxu0
  %v132 = vadd.f32 %v58, %v131
  %v133 = vpop.f32.mrf.mxu0
  %v134 = vadd.f32 %v62, %v133
  %135 = vdwg.mxu0
  %v136 = vmax.f32 %v132, 0.0
  %v137 = vmax.f32 %v134, 0.0
  %v138 = vld [vmem:[%s3] sm:$0xff]
  %v139 = vld [vmem:[%s3 + $0x8] sm:$0xff]
  %v140 = vld [vmem:[%s3 + $0x10] sm:$0xff]
  %v141 = vld [vmem:[%s3 + $0x18] sm:$0xff]
  %v142 = vld [vmem:[%s3 + $0x20] sm:$0xff]
  %v143 = vld [vmem:[%s3 + $0x28] sm:$0xff]
  %v144 = vld [vmem:[%s3 + $0x30] sm:$0xff]
  %v145 = vld [vmem:[%s3 + $0x38] sm:$0xff]
  %v146 = vld [vmem:[%s3 + $0x40] sm:$0xff]
  %v147 = vld [vmem:[%s3 + $0x48] sm:$0xff]
  %v148 = vld [vmem:[%s3 + $0x50] sm:$0xff]
  %v149 = vld [vmem:[%s3 + $0x58] sm:$0xff]
  %v150 = vld [vmem:[%s3 + $0x60] sm:$0xff]
  %v151 = vld [vmem:[%s3 + $0x68] sm:$0xff]
  %v152 = vld [vmem:[%s3 + $0x70] sm:$0xff]
  %v153 = vld [vmem:[%s3 + $0x78] sm:$0xff]
  %v154 = vld [vmem:[%s3 + $0x80] sm:$0xff]
  %v155 = vld [vmem:[%s3 + $0x88] sm:$0xff]
  %v156 = vld [vmem:[%s3 + $0x90] sm:$0xff]
  %v157 = vld [vmem:[%s3 + $0x98] sm:$0xff]
  %v158 = vld [vmem:[%s3 + $0xa0] sm:$0xff]
  %v159 = vld [vmem:[%s3 + $0xa8] sm:$0xff]
  %v160 = vld [vmem:[%s3 + $0xb0] sm:$0xff]
  %v161 = vld [vmem:[%s3 + $0xb8] sm:$0xff]
  %v162 = vld [vmem:[%s3 + $0xc0] sm:$0xff]
  %v163 = vld [vmem:[%s3 + $0xc8] sm:$0xff]
  %v164 = vld [vmem:[%s3 + $0xd0] sm:$0xff]
  %v165 = vld [vmem:[%s3 + $0xd8] sm:$0xff]
  %v166 = vld [vmem:[%s3 + $0xe0] sm:$0xff]
  %v167 = vld [vmem:[%s3 + $0xe8] sm:$0xff]
  %v168 = vld [vmem:[%s3 + $0xf0] sm:$0xff]
  %v169 = vld [vmem:[%s3 + $0xf8] sm:$0xff]
  %v170 = vld [vmem:[%s4] sm:$0x1]
  %171 = vmatprep.subr.mxu0 0.0
  %172 = vmatpush1.msra.mxu0 %v153
  %173 = vmatprep.subr.mxu0 0.0
  %174 = vmatpush1.msra.mxu0 %v152
  %175 = vmatprep.subr.mxu0 0.0
  %176 = vmatpush1.msra.mxu0 %v151
  %177 = vmatprep.subr.mxu0 0.0
  %178 = vmatpush1.msra.mxu0 %v150
  %179 = vmatprep.subr.mxu0 0.0
  %180 = vmatpush1.msra.mxu0 %v149
  %181 = vmatprep.subr.mxu0 0.0
  %182 = vmatpush1.msra.mxu0 %v148
  %183 = vmatprep.subr.mxu0 0.0
  %184 = vmatpush1.msra.mxu0 %v147
  %185 = vmatprep.subr.mxu0 0.0
  %186 = vmatpush1.msra.mxu0 %v146
  %187 = vmatprep.subr.mxu0 0.0
  %188 = vmatpush1.msra.mxu0 %v145
  %189 = vmatprep.subr.mxu0 0.0
  %190 = vmatpush1.msra.mxu0 %v144
  %191 = vmatprep.subr.mxu0 0.0
  %192 = vmatpush1.msra.mxu0 %v143
  %193 = vmatprep.subr.mxu0 0.0
  %194 = vmatpush1.msra.mxu0 %v142
  %195 = vmatprep.subr.mxu0 0.0
  %196 = vmatpush1.msra.mxu0 %v141
  %197 = vmatprep.subr.mxu0 0.0
  %198 = vmatpush1.msra.mxu0 %v140
  %199 = vmatprep.subr.mxu0 0.0
  %200 = vmatpush1.msra.mxu0 %v139
  %201 = vmatprep.subr.mxu0 0.0
  %202 = vmatpush1.msra.mxu0 %v138
  %203 = vmatprep.subr.mxu0 0.0
  %204 = vmatpush2.msra.mxu0 %v169
  %205 = vmatprep.subr.mxu0 0.0
  %206 = vmatpush2.msra.mxu0 %v168
  %207 = vmatprep.subr.mxu0 0.0
  %208 = vmatpush2.msra.mxu0 %v167
  %209 = vmatprep.subr.mxu0 0.0
  %210 = vmatpush2.msra.mxu0 %v166
  %211 = vmatprep.subr.mxu0 0.0
  %212 = vmatpush2.msra.mxu0 %v165
  %213 = vmatprep.subr.mxu0 0.0
  %214 = vmatpush2.msra.mxu0 %v164
  %215 = vmatprep.subr.mxu0 0.0
  %216 = vmatpush2.msra.mxu0 %v163
  %217 = vmatprep.subr.mxu0 0.0
  %218 = vmatpush2.msra.mxu0 %v162
  %219 = vmatprep.subr.mxu0 0.0
  %220 = vmatpush2.msra.mxu0 %v161
  %221 = vmatprep.subr.mxu0 0.0
  %222 = vmatpush2.msra.mxu0 %v160
  %223 = vmatprep.subr.mxu0 0.0
  %224 = vmatpush2.msra.mxu0 %v159
  %225 = vmatprep.subr.mxu0 0.0
  %226 = vmatpush2.msra.mxu0 %v158
  %227 = vmatprep.subr.mxu0 0.0
  %228 = vmatpush2.msra.mxu0 %v157
  %229 = vmatprep.subr.mxu0 0.0
  %230 = vmatpush2.msra.mxu0 %v156
  %231 = vmatprep.subr.mxu0 0.0
  %232 = vmatpush2.msra.mxu0 %v155
  %233 = vmatprep.subr.mxu0 0.0
  %234 = vmatpush2.msra.mxu0 %v154
  %235 = vmatprep.mubr.f32.mxu0 %v137
  %236 = vmatmul.mubr.f32.gmra.mxu0 %v136
  %v237 = vpop.f32.mrf.mxu0
  %v238 = vadd.f32 %v170, %v237
  %v239 = vpop.f32.mrf.mxu0
  %240 = vdwg.mxu0
  %v241 = vxor.u32 %v238, 2147483648
  %v242 = vmul.f32 %v241, 1.442695
  %v243 = vpow.pop %v242
  %v244 = vadd.f32 %v243, 1.0
  %v245 = vrcp.pop %v244
  %v246 = vmul.f32 1.0, %v245
  %v247 = vmul.f32 %v246, 2.0
  %vm248 = vcmask 253952
  %249 = vst.msk [vmem:[%s5] sm:$0x1] %vm248, %v247
  // Predicated region
  $region22: #{actor_forward.1} parent=0 // pred_check
    _
  $region23: #{actor_forward.1} parent=0 // pred_check_branch
    %251 = sbr.rel (0) target = $region25
  $region24: #{actor_forward.1} parent=0 // pred_region
    _
  $region25: #{actor_forward.1} parent=0 // pred_fallthru
    _
  // Predicated region
  $region26: #{actor_forward.1} parent=0 // pred_check
    _
  $region27: #{actor_forward.1} parent=0 // pred_check_branch
    %253 = sbr.rel (0) target = $region29
  $region28: #{actor_forward.1} parent=0 // pred_region
    _
  $region29: #{actor_forward.1} parent=0 // pred_fallthru
    _

</llo_original>
